<compile_context>
chip_gen: v7x
topology: tpu7x:2x2x1
jax: 0.10.0
libtpu: 0.0.40
codegen_flags: <defaults>
</compile_context>

<pallas_src>
import functools as ft

import jax
import jax.numpy as jnp
from jax.experimental import pallas as pl
from jax.experimental.pallas import tpu as pltpu


def _copy_kernel(x_ref, o_ref):
    """Identity copy of one (rows, cols) VMEM tile."""
    o_ref[...] = x_ref[...]


def _prod(xs):
    p = 1
    for s in xs:
        p *= int(s)
    return p


def _resolve_view_shape(n_rest, shape):
    """Resolve torch.view-style shape (may contain one -1) for n_rest elems."""
    shape = list(int(s) for s in shape)
    neg = [i for i, s in enumerate(shape) if s == -1]
    if len(neg) > 1:
        raise ValueError("only one -1 allowed in view shape")
    known = 1
    for s in shape:
        if s != -1:
            known *= s
    if neg:
        if known == 0 or n_rest % known != 0:
            raise ValueError(f"cannot infer -1 for view shape {shape}")
        shape[neg[0]] = n_rest // known
    if _prod(shape) != n_rest:
        raise ValueError(f"view shape {shape} incompatible with {n_rest} elems")
    return tuple(shape)


def _pallas_copy_2d(x2):
    """Tiled, pipelined HBM->HBM identity copy of a 2-D array via Pallas."""
    B, F = x2.shape
    itemsize = jnp.dtype(x2.dtype).itemsize

    # VMEM budget for the 4 live tile buffers (double-buffered input + output).
    budget = 16 * 1024 * 1024

    def fits(tr, tc):
        return 4 * tr * tc * itemsize <= budget

    # Column tile: full width if even a thin (8-row) slab fits; otherwise a
    # lane-dense multiple of 128 so stores stay unmasked vst.
    if F % 128 == 0 and not fits(8, F):
        tc = (budget // (4 * 8 * itemsize)) // 128 * 128
        tc = int(max(128, min(tc, F)))
    else:
        tc = F

    # Row tile: as many rows as the budget allows, rounded to the sublane
    # quantum (8), or the full batch extent when it already fits.
    max_rows = max(1, budget // (4 * tc * itemsize))
    if max_rows >= B:
        tr = B
    else:
        tr = int(min(B, max(8, (max_rows // 8) * 8)))

    grid = (pl.cdiv(B, tr), pl.cdiv(F, tc))

    # Explicit scoped-VMEM limit with headroom; capped at v7x physical VMEM.
    vmem_limit = int(min(64 * 2**20,
                         max(32 * 2**20, 4 * tr * tc * itemsize + (4 << 20))))

    return pl.pallas_call(
        _copy_kernel,
        grid=grid,
        in_specs=[pl.BlockSpec((tr, tc), lambda i, j: (i, j))],
        out_specs=pl.BlockSpec((tr, tc), lambda i, j: (i, j)),
        out_shape=jax.ShapeDtypeStruct((B, F), x2.dtype),
        compiler_params=pltpu.CompilerParams(
            dimension_semantics=("parallel", "parallel"),
            vmem_limit_bytes=vmem_limit,
        ),
        cost_estimate=pl.CostEstimate(
            flops=0,
            transcendentals=0,
            bytes_accessed=2 * B * F * itemsize,
        ),
    )(x2)


def pallas_view(x, shape):
    """Equivalent of View(shape).forward(x) = x.view(x.size(0), *shape)."""
    B = int(x.shape[0])
    F = _prod(x.shape[1:])
    out_rest = _resolve_view_shape(F, shape)

    # Glue: contiguous flatten to a lane-dense 2-D slab (metadata only).
    x2 = jnp.reshape(x, (B, F))

    # Hot path: tiled Pallas identity copy (materializes the viewed output).
    y2 = _pallas_copy_2d(x2)

    # Glue: reinterpret to the requested view shape (metadata only).
    return jnp.reshape(y2, (B,) + out_rest)


if __name__ == "__main__":
    key = jax.random.PRNGKey(0)

    # Input consistent with View on a [2, 4, 16, 16] tensor.
    x = jax.random.normal(key, (2, 4, 16, 16), dtype=jnp.float32)

    # View(shape=(4, 256)): [2, 4, 16, 16] -> [2, 4, 256]
    out = pallas_view(x, (4, 256))
    out = jax.block_until_ready(out)
    ref = jnp.reshape(x, (2, 4, 256))
    assert out.shape == ref.shape and out.dtype == ref.dtype
    assert jnp.array_equal(out, ref)

    # View(shape=(-1, 64)): [2, 4, 16, 16] -> [2, 16, 64]  (infers -1 like torch)
    out2 = pallas_view(x, (-1, 64))
    out2 = jax.block_until_ready(out2)
    ref2 = jnp.reshape(x, (2, 16, 64))
    assert out2.shape == ref2.shape
    assert jnp.array_equal(out2, ref2)

    # bf16 / flatten-to-vector case: View(shape=(1024,)): -> [2, 1024]
    xb = x.astype(jnp.bfloat16)
    out3 = pallas_view(xb, (1024,))
    out3 = jax.block_until_ready(out3)
    ref3 = jnp.reshape(xb, (2, 1024))
    assert out3.shape == ref3.shape and out3.dtype == ref3.dtype
    assert jnp.array_equal(out3, ref3)

    print("KERNEL_OK")
</pallas_src>

<mosaic_0001>
module attributes {stable_mosaic.version = 11 : i64} {
  func.func @_copy_kernel(%arg0: i32, %arg1: i32, %arg2: memref<2x1024xf32, #tpu.memory_space<vmem>>, %arg3: memref<2x1024xf32, #tpu.memory_space<vmem>>) attributes {dimension_semantics = [#tpu.dimension_semantics<parallel>, #tpu.dimension_semantics<parallel>], iteration_bounds = array<i64: 1, 1>, scalar_prefetch = 0 : i64, scratch_operands = 0 : i64, tpu.core_type = #tpu.core_type<tc>, window_params = [{transform_indices = @transform_0, window_bounds = array<i64: 2, 1024>}, {transform_indices = @transform_1, window_bounds = array<i64: 2, 1024>}]} {
    %c0 = arith.constant 0 : index
    %c0_0 = arith.constant 0 : index
    %0 = vector.load %arg2[%c0, %c0_0] : memref<2x1024xf32, #tpu.memory_space<vmem>>, vector<2x1024xf32>
    %c0_1 = arith.constant 0 : index
    %c0_2 = arith.constant 0 : index
    %1 = vector.load %arg3[%c0_1, %c0_2] : memref<2x1024xf32, #tpu.memory_space<vmem>>, vector<2x1024xf32>
    tpu.vector_store %arg3[%c0_1, %c0_2], %0 {strides = array<i32>} : memref<2x1024xf32, #tpu.memory_space<vmem>>, vector<2x1024xf32>,
    return
  }
  func.func @transform_0(%arg0: i32, %arg1: i32) -> (i32, i32) {
    %c0_i32 = arith.constant 0 : i32
    return %arg0, %arg1 : i32, i32
  }
  func.func @transform_1(%arg0: i32, %arg1: i32) -> (i32, i32) {
    %c0_i32 = arith.constant 0 : i32
    return %arg0, %arg1 : i32, i32
  }
}

</mosaic_0001>

<llo_original>
// kernel: tpu_custom_call.1
$region0: #{tpu_custom_call.1}
  #allocation0 [shape = 'u32[]', space=smem, size = 0x4, offset = 0x4, fixed_abs, tag = 'smem constant byte address 0x4 - core index']
  #allocation1 [shape = 'u32[144,128]{1,0:T(1,128)}', space=vmem, size = 0x12000, scoped, tag = 'internal scratch']
  %s0 = inlined_call_operand.hbm [shape: f32[2,1024], index: 0, kind: input, shape index: {}]
  %s1 = inlined_call_operand.hbm [shape: f32[2,1024], index: 1, kind: output, shape index: {}]
  %s2 = sld [smem:[#allocation0]]
  $region18: #{tpu_custom_call.1} parent=0
    _
  %s4 = ssub.s32 1, %s2
  %s5 = scalar_select 0, %s4, %s2
  $region1: #{tpu_custom_call.1} parent=0
    #allocation2 [shape = 'u8[8192]{0}', space=vmem, size = 0x2000, scoped, tag = 'input window, operand 0, single buffered']
    #allocation3 [shape = 's32[1]{0}', space=sflag, size = 0x4, scoped, tag = 'scoped memory for tpu_custom_call.1']
    #allocation4 [shape = 's32[1]{0}', space=sflag, size = 0x4, scoped, tag = 'scoped memory for tpu_custom_call.1']
    #allocation5 [shape = 'u8[8192]{0}', space=vmem, size = 0x2000, scoped, tag = 'output window, operand 0, single buffered']
    %6 = vsyncpa [#allocation3], 0
    %7 = vsyncpa [#allocation4], 0
    // Predicated region
    $region2: #{tpu_custom_call.1} parent=1 // pred_check
      _
    $region3: #{tpu_custom_call.1} parent=1 // pred_check_branch
      %9 = sbr.rel (0) target = $region5
    $region4: #{tpu_custom_call.1} parent=1 // pred_region
      %s11 = ssub.s32 256, 256
      %12 = vsyncadd [#allocation3], %s11
      %s14 = sshll.u32 [#allocation2], 4
      %s15 = int_to_ptr.vmem [resolvable:$true] %s14
      %17 = dma.hbm_to_vmem [thread:$0]  %s0, 256, %s15, [#allocation3]
    $region5: #{tpu_custom_call.1} parent=1 // pred_fallthru
      _
    // Predicated region
    $region6: #{tpu_custom_call.1} parent=1 // pred_check
      _
    $region7: #{tpu_custom_call.1} parent=1 // pred_check_branch
      %19 = sbr.rel (0) target = $region9
    $region8: #{tpu_custom_call.1} parent=1 // pred_region
      %20 = dma.done [#allocation3], 256
    $region9: #{tpu_custom_call.1} parent=1 // pred_fallthru
      _
    %v21 = vld [vmem:[#allocation2] sm:$0xff]
    %v22 = vld [vmem:[#allocation2 + $0x8] sm:$0xff]
    %23 = vst [vmem:[#allocation5] sm:$0xff] %v21
    %24 = vst [vmem:[#allocation5 + $0x8] sm:$0xff] %v22
    // Predicated region
    $region10: #{tpu_custom_call.1} parent=1 // pred_check
      _
    $region11: #{tpu_custom_call.1} parent=1 // pred_check_branch
      %26 = sbr.rel (0) target = $region13
    $region12: #{tpu_custom_call.1} parent=1 // pred_region
      %s28 = ssub.s32 256, 256
      %29 = vsyncadd [#allocation4], %s28
      %s31 = sshll.u32 [#allocation5], 4
      %s32 = int_to_ptr.vmem [resolvable:$true] %s31
      %34 = dma.vmem_to_hbm [thread:$0]  %s32, 256, %s1, [#allocation4]
    $region13: #{tpu_custom_call.1} parent=1 // pred_fallthru
      _
    // Predicated region
    $region14: #{tpu_custom_call.1} parent=1 // pred_check
      _
    $region15: #{tpu_custom_call.1} parent=1 // pred_check_branch
      %36 = sbr.rel (0) target = $region17
    $region16: #{tpu_custom_call.1} parent=1 // pred_region
      %37 = dma.done [#allocation4], 256
    $region17: #{tpu_custom_call.1} parent=1 // pred_fallthru
      _
    %38 = vsyncpa [#allocation3], 1
    %39 = vsyncpa [#allocation4], 1

</llo_original>
